<compile_context>
chip_gen: v6e
topology: v6e:2x2x1
jax: 0.10.0
libtpu: 0.0.40
codegen_flags: <defaults>
</compile_context>

<pallas_src>
import functools

import jax
import jax.numpy as jnp
from jax import lax
from jax.experimental import pallas as pl
from jax.experimental.pallas import tpu as pltpu


# "Whole problem resident in VMEM" threshold on bytes(x); in+out resident is
# ~2x this.  Conservative for every generation (v5e 16 MiB scoped default,
# v7x 64 MiB physical), so the single-shot path is always safe and the gridded
# two-pass path kicks in well before any VMEM pressure.
_SMALL_PATH_MAX_X_BYTES = 4 * 1024 * 1024

_DEFAULT_HW_TILE = 512  # lanes per tile -> (256, 512) f32 tile = 512 KiB


def _bn_small_kernel(x_ref, gamma_ref, beta_ref, o_ref, *, eps, inv_count):
    """Single-shot BN. x_ref: (N, C, HW); gamma/beta: (1, C, 1)."""
    x = x_ref[...]
    # One read of x: sum and sum-of-squares (no live `centered` temporary).
    s1 = jnp.sum(jnp.sum(x, axis=2, keepdims=True), axis=0, keepdims=True)
    s2 = jnp.sum(jnp.sum(x * x, axis=2, keepdims=True), axis=0, keepdims=True)
    mean = s1 * inv_count                                   # (1, C, 1)
    var = s2 * inv_count - mean * mean                      # biased variance
    inv_std = lax.rsqrt(var + eps)
    scale = gamma_ref[...] * inv_std                        # folded affine
    shift = beta_ref[...] - mean * scale
    o_ref[...] = x * scale + shift


def _bn_stats_kernel(x_ref, gamma_ref, beta_ref, s_ref, b_ref,
                     sum_sc, sq_sc, *, eps, inv_count, hw, hw_tile):
    """Pass 1: accumulate per-channel sum/sumsq; emit folded scale/shift."""
    n = pl.program_id(0)
    j = pl.program_id(1)

    @pl.when(jnp.logical_and(n == 0, j == 0))
    def _init():
        sum_sc[...] = jnp.zeros_like(sum_sc)
        sq_sc[...] = jnp.zeros_like(sq_sc)

    x = x_ref[...]                                          # (1, C, hw_tile)
    if hw % hw_tile != 0:
        # Partial last tile: mask out-of-range lanes (their contents are
        # unspecified).  Static no-op when HW divides evenly.
        col = lax.broadcasted_iota(jnp.int32, x.shape, 2) + j * hw_tile
        x = jnp.where(col < hw, x, 0.0)
    sum_sc[...] += jnp.sum(x, axis=2, keepdims=True)        # (1, C, 1)
    sq_sc[...] += jnp.sum(x * x, axis=2, keepdims=True)

    @pl.when(jnp.logical_and(n == pl.num_programs(0) - 1,
                             j == pl.num_programs(1) - 1))
    def _finalize():
        mean = sum_sc[...] * inv_count
        var = sq_sc[...] * inv_count - mean * mean
        inv_std = lax.rsqrt(var + eps)
        scale = gamma_ref[...] * inv_std
        s_ref[...] = scale
        b_ref[...] = beta_ref[...] - mean * scale


def _bn_norm_kernel(x_ref, s_ref, b_ref, o_ref):
    """Pass 2: o = x * s + b with per-channel folded scale/shift."""
    o_ref[...] = x_ref[...] * s_ref[...] + b_ref[...]


def batchnorm2d_pallas(x_nchw, gamma, beta, eps=1e-3, *,
                       small_path_max_x_bytes=_SMALL_PATH_MAX_X_BYTES,
                       hw_tile=None):
    """Training-mode BatchNorm2d forward (batch stats + affine), NCHW in/out."""
    N, C, H, W = x_nchw.shape
    HW = H * W
    inv_count = 1.0 / float(N * HW)

    # Free reshape only -- no transposes, no extra HBM passes.
    x = x_nchw.reshape(N, C, HW).astype(jnp.float32)
    g = gamma.reshape(1, C, 1).astype(jnp.float32)
    b = beta.reshape(1, C, 1).astype(jnp.float32)
    x_bytes = int(x.size) * 4

    if x_bytes <= small_path_max_x_bytes:
        out = pl.pallas_call(
            functools.partial(_bn_small_kernel, eps=eps, inv_count=inv_count),
            out_shape=jax.ShapeDtypeStruct((N, C, HW), jnp.float32),
            in_specs=[pl.BlockSpec(memory_space=pltpu.MemorySpace.VMEM)] * 3,
            out_specs=pl.BlockSpec(memory_space=pltpu.MemorySpace.VMEM),
            compiler_params=pltpu.CompilerParams(
                vmem_limit_bytes=2 * x_bytes + (8 << 20)),
            cost_estimate=pl.CostEstimate(
                flops=5 * N * C * HW, transcendentals=C,
                bytes_accessed=2 * x_bytes),
        )(x, g, b)
        return out.reshape(N, C, H, W)

    # ------- gridded two-pass path (large N*H*W) -------
    if hw_tile is None:
        hw_tile = HW if HW <= _DEFAULT_HW_TILE else _DEFAULT_HW_TILE
    n_hw = pl.cdiv(HW, hw_tile)
    tile_bytes = C * hw_tile * 4

    x_spec = pl.BlockSpec((1, C, hw_tile), lambda n, j: (n, 0, j))
    col_spec = pl.BlockSpec((1, C, 1), lambda n, j: (0, 0, 0))

    # Pass 1: per-channel sum/sumsq accumulation -> folded (scale, shift).
    scale, shift = pl.pallas_call(
        functools.partial(_bn_stats_kernel, eps=eps, inv_count=inv_count,
                          hw=HW, hw_tile=hw_tile),
        out_shape=(jax.ShapeDtypeStruct((1, C, 1), jnp.float32),
                   jax.ShapeDtypeStruct((1, C, 1), jnp.float32)),
        grid_spec=pltpu.PrefetchScalarGridSpec(
            num_scalar_prefetch=0,
            grid=(N, n_hw),
            in_specs=[x_spec, col_spec, col_spec],
            out_specs=[col_spec, col_spec],
            scratch_shapes=[pltpu.VMEM((1, C, 1), jnp.float32),
                            pltpu.VMEM((1, C, 1), jnp.float32)]),
        compiler_params=pltpu.CompilerParams(
            dimension_semantics=("arbitrary", "arbitrary"),
            vmem_limit_bytes=4 * tile_bytes + (4 << 20)),
        cost_estimate=pl.CostEstimate(
            flops=3 * N * C * HW, transcendentals=C,
            bytes_accessed=x_bytes),
    )(x, g, b)

    # Pass 2: normalize, fully parallel grid (megacore-shardable on v7x).
    out = pl.pallas_call(
        _bn_norm_kernel,
        out_shape=jax.ShapeDtypeStruct((N, C, HW), jnp.float32),
        grid_spec=pltpu.PrefetchScalarGridSpec(
            num_scalar_prefetch=0,
            grid=(N, n_hw),
            in_specs=[x_spec, col_spec, col_spec],
            out_specs=x_spec),
        compiler_params=pltpu.CompilerParams(
            dimension_semantics=("parallel", "parallel"),
            vmem_limit_bytes=6 * tile_bytes + (4 << 20)),
        cost_estimate=pl.CostEstimate(
            flops=2 * N * C * HW, transcendentals=0,
            bytes_accessed=2 * x_bytes),
    )(x, scale, shift)
    return out.reshape(N, C, H, W)


if __name__ == "__main__":
    key = jax.random.PRNGKey(0)
    eps = 1e-3
    C = 256

    def reference(x, gamma, beta):
        mean = jnp.mean(x, axis=(0, 2, 3), keepdims=True)
        var = jnp.mean((x - mean) ** 2, axis=(0, 2, 3), keepdims=True)
        return ((x - mean) * lax.rsqrt(var + eps) * gamma.reshape(1, C, 1, 1)
                + beta.reshape(1, C, 1, 1))

    k1, k2, k3, k4, k5 = jax.random.split(key, 5)

    # 1) Exact module shape (1, 256, 7, 7), PyTorch default affine init
    #    (weight=1, bias=0): single-shot resident path, no grid.
    gamma1 = jnp.ones((C,), dtype=jnp.float32)
    beta1 = jnp.zeros((C,), dtype=jnp.float32)
    x1 = jax.random.normal(k1, (1, C, 7, 7), dtype=jnp.float32)
    out1 = jax.block_until_ready(batchnorm2d_pallas(x1, gamma1, beta1, eps=eps))
    assert out1.shape == x1.shape
    assert jnp.max(jnp.abs(out1 - reference(x1, gamma1, beta1))) < 3e-4

    # Non-trivial affine params for the remaining checks.
    gamma2 = 1.0 + 0.1 * jax.random.normal(k3, (C,), dtype=jnp.float32)
    beta2 = 0.1 * jax.random.normal(k4, (C,), dtype=jnp.float32)

    # 2) Force the gridded two-pass path, including a partial last HW tile
    #    (HW=289 = 2*128 + 33) and batch > 1.
    x2 = jax.random.normal(k2, (2, C, 17, 17), dtype=jnp.float32)
    out2 = jax.block_until_ready(
        batchnorm2d_pallas(x2, gamma2, beta2, eps=eps,
                           small_path_max_x_bytes=0, hw_tile=128))
    assert out2.shape == x2.shape
    assert jnp.max(jnp.abs(out2 - reference(x2, gamma2, beta2))) < 3e-4

    # 3) Small resident path with batch > 1 (exercises the N-axis reduce).
    x3 = jax.random.normal(k5, (2, C, 7, 7), dtype=jnp.float32)
    out3 = jax.block_until_ready(batchnorm2d_pallas(x3, gamma2, beta2, eps=eps))
    assert jnp.max(jnp.abs(out3 - reference(x3, gamma2, beta2))) < 3e-4

    print("KERNEL_OK")
</pallas_src>

<mosaic_0001>
module attributes {stable_mosaic.version = 11 : i64} {
  func.func @_bn_small_kernel(%arg0: memref<1x256x49xf32, #tpu.memory_space<vmem>>, %arg1: memref<1x256x1xf32, #tpu.memory_space<vmem>>, %arg2: memref<1x256x1xf32, #tpu.memory_space<vmem>>, %arg3: memref<1x256x49xf32, #tpu.memory_space<vmem>>) attributes {dimension_semantics = [], scalar_prefetch = 0 : i64, scratch_operands = 0 : i64, tpu.core_type = #tpu.core_type<tc>} {
    %c0 = arith.constant 0 : index
    %c0_0 = arith.constant 0 : index
    %c0_1 = arith.constant 0 : index
    %0 = vector.load %arg0[%c0, %c0_0, %c0_1] : memref<1x256x49xf32, #tpu.memory_space<vmem>>, vector<1x256x49xf32>
    %cst = arith.constant dense<0.000000e+00> : vector<1x256xf32>
    %1 = vector.multi_reduction <add>, %0, %cst [2] : vector<1x256x49xf32> to vector<1x256xf32>
    %2 = vector.shape_cast %1 : vector<1x256xf32> to vector<1x256x1xf32>
    %cst_2 = arith.constant dense<0.000000e+00> : vector<256x1xf32>
    %3 = vector.multi_reduction <add>, %2, %cst_2 [0] : vector<1x256x1xf32> to vector<256x1xf32>
    %4 = vector.shape_cast %3 : vector<256x1xf32> to vector<1x256x1xf32>
    %5 = arith.mulf %0, %0 : vector<1x256x49xf32>
    %cst_3 = arith.constant dense<0.000000e+00> : vector<1x256xf32>
    %6 = vector.multi_reduction <add>, %5, %cst_3 [2] : vector<1x256x49xf32> to vector<1x256xf32>
    %7 = vector.shape_cast %6 : vector<1x256xf32> to vector<1x256x1xf32>
    %cst_4 = arith.constant dense<0.000000e+00> : vector<256x1xf32>
    %8 = vector.multi_reduction <add>, %7, %cst_4 [0] : vector<1x256x1xf32> to vector<256x1xf32>
    %9 = vector.shape_cast %8 : vector<256x1xf32> to vector<1x256x1xf32>
    %cst_5 = arith.constant 0.0204081628 : f32
    %10 = vector.broadcast %cst_5 : f32 to vector<1x256x1xf32>
    %11 = arith.mulf %4, %10 : vector<1x256x1xf32>
    %cst_6 = arith.constant 0.0204081628 : f32
    %12 = vector.broadcast %cst_6 : f32 to vector<1x256x1xf32>
    %13 = arith.mulf %9, %12 : vector<1x256x1xf32>
    %14 = arith.mulf %11, %11 : vector<1x256x1xf32>
    %15 = arith.subf %13, %14 : vector<1x256x1xf32>
    %cst_7 = arith.constant 1.000000e-03 : f32
    %16 = vector.broadcast %cst_7 : f32 to vector<1x256x1xf32>
    %17 = arith.addf %15, %16 : vector<1x256x1xf32>
    %18 = math.rsqrt %17 : vector<1x256x1xf32>
    %c0_8 = arith.constant 0 : index
    %c0_9 = arith.constant 0 : index
    %c0_10 = arith.constant 0 : index
    %19 = vector.load %arg1[%c0_8, %c0_9, %c0_10] : memref<1x256x1xf32, #tpu.memory_space<vmem>>, vector<1x256x1xf32>
    %20 = arith.mulf %19, %18 : vector<1x256x1xf32>
    %c0_11 = arith.constant 0 : index
    %c0_12 = arith.constant 0 : index
    %c0_13 = arith.constant 0 : index
    %21 = vector.load %arg2[%c0_11, %c0_12, %c0_13] : memref<1x256x1xf32, #tpu.memory_space<vmem>>, vector<1x256x1xf32>
    %22 = arith.mulf %11, %20 : vector<1x256x1xf32>
    %23 = arith.subf %21, %22 : vector<1x256x1xf32>
    %24 = vector.broadcast %20 : vector<1x256x1xf32> to vector<1x256x49xf32>
    %25 = arith.mulf %0, %24 : vector<1x256x49xf32>
    %26 = vector.broadcast %23 : vector<1x256x1xf32> to vector<1x256x49xf32>
    %27 = arith.addf %25, %26 : vector<1x256x49xf32>
    %c0_14 = arith.constant 0 : index
    %c0_15 = arith.constant 0 : index
    %c0_16 = arith.constant 0 : index
    %28 = vector.load %arg3[%c0_14, %c0_15, %c0_16] : memref<1x256x49xf32, #tpu.memory_space<vmem>>, vector<1x256x49xf32>
    tpu.vector_store %arg3[%c0_14, %c0_15, %c0_16], %27 {strides = array<i32>} : memref<1x256x49xf32, #tpu.memory_space<vmem>>, vector<1x256x49xf32>,
    return
  }
}

</mosaic_0001>

<llo_original>
// kernel: tpu_custom_call.1
$region0: #{tpu_custom_call.1}
  #allocation0 [shape = 'u32[]', space=smem, size = 0x4, offset = 0x4, fixed_abs, tag = 'smem constant byte address 0x4 - core index']
  #allocation1 [shape = 'u32[144,128]{1,0:T(1,128)}', space=vmem, size = 0x12000, scoped, tag = 'internal scratch']
  %s0 = inlined_call_operand.vmem [shape: f32[1,256,49], index: 0, kind: input, shape index: {}]
  %s1 = inlined_call_operand.vmem [shape: f32[1,256,1], index: 1, kind: input, shape index: {}]
  %s2 = inlined_call_operand.vmem [shape: f32[1,256,1], index: 2, kind: input, shape index: {}]
  %s3 = inlined_call_operand.vmem [shape: f32[1,256,49], index: 3, kind: output, shape index: {}]
  %s4 = sld [smem:[#allocation0]]
  $region22: #{tpu_custom_call.1} parent=0
    _
  %s6 = ssub.s32 1, %s4
  %s7 = scalar_select 0, %s6, %s4
  // Predicated region
  $region2: #{tpu_custom_call.1} parent=0 // pred_check
    _
  $region3: #{tpu_custom_call.1} parent=0 // pred_check_branch
    %9 = sbr.rel (0) target = $region5
  $region4: #{tpu_custom_call.1} parent=0 // pred_region
    _
  $region5: #{tpu_custom_call.1} parent=0 // pred_fallthru
    _
  // Predicated region
  $region6: #{tpu_custom_call.1} parent=0 // pred_check
    _
  $region7: #{tpu_custom_call.1} parent=0 // pred_check_branch
    %11 = sbr.rel (0) target = $region9
  $region8: #{tpu_custom_call.1} parent=0 // pred_region
    _
  $region9: #{tpu_custom_call.1} parent=0 // pred_fallthru
    _
  // Predicated region
  $region10: #{tpu_custom_call.1} parent=0 // pred_check
    _
  $region11: #{tpu_custom_call.1} parent=0 // pred_check_branch
    %13 = sbr.rel (0) target = $region13
  $region12: #{tpu_custom_call.1} parent=0 // pred_region
    _
  $region13: #{tpu_custom_call.1} parent=0 // pred_fallthru
    _
  %v14 = vld [vmem:[%s0] sm:$0xff]
  %v15 = vld [vmem:[%s0 + $0x8] sm:$0xff]
  %v16 = vld [vmem:[%s0 + $0x10] sm:$0xff]
  %v17 = vld [vmem:[%s0 + $0x18] sm:$0xff]
  %v18 = vld [vmem:[%s0 + $0x20] sm:$0xff]
  %v19 = vld [vmem:[%s0 + $0x28] sm:$0xff]
  %v20 = vld [vmem:[%s0 + $0x30] sm:$0xff]
  %v21 = vld [vmem:[%s0 + $0x38] sm:$0xff]
  %v22 = vld [vmem:[%s0 + $0x40] sm:$0xff]
  %v23 = vld [vmem:[%s0 + $0x48] sm:$0xff]
  %v24 = vld [vmem:[%s0 + $0x50] sm:$0xff]
  %v25 = vld [vmem:[%s0 + $0x58] sm:$0xff]
  %v26 = vld [vmem:[%s0 + $0x60] sm:$0xff]
  %v27 = vld [vmem:[%s0 + $0x68] sm:$0xff]
  %v28 = vld [vmem:[%s0 + $0x70] sm:$0xff]
  %v29 = vld [vmem:[%s0 + $0x78] sm:$0xff]
  %v30 = vld [vmem:[%s0 + $0x80] sm:$0xff]
  %v31 = vld [vmem:[%s0 + $0x88] sm:$0xff]
  %v32 = vld [vmem:[%s0 + $0x90] sm:$0xff]
  %v33 = vld [vmem:[%s0 + $0x98] sm:$0xff]
  %v34 = vld [vmem:[%s0 + $0xa0] sm:$0xff]
  %v35 = vld [vmem:[%s0 + $0xa8] sm:$0xff]
  %v36 = vld [vmem:[%s0 + $0xb0] sm:$0xff]
  %v37 = vld [vmem:[%s0 + $0xb8] sm:$0xff]
  %v38 = vld [vmem:[%s0 + $0xc0] sm:$0xff]
  %v39 = vld [vmem:[%s0 + $0xc8] sm:$0xff]
  %v40 = vld [vmem:[%s0 + $0xd0] sm:$0xff]
  %v41 = vld [vmem:[%s0 + $0xd8] sm:$0xff]
  %v42 = vld [vmem:[%s0 + $0xe0] sm:$0xff]
  %v43 = vld [vmem:[%s0 + $0xe8] sm:$0xff]
  %v44 = vld [vmem:[%s0 + $0xf0] sm:$0xff]
  %v45 = vld [vmem:[%s0 + $0xf8] sm:$0xff]
  %vm46 = vcmask 400384
  %v47 = vsel %vm46, %v14, 0.0
  %48 = vadd.xlane.f32.xlu0 %v47
  %v49 = vpop.xlane.xlu0 %48
  %v50 = vsel %vm46, %v15, 0.0
  %51 = vadd.xlane.f32.xlu0 %v50
  %v52 = vpop.xlane.xlu0 %51
  %v53 = vsel %vm46, %v16, 0.0
  %54 = vadd.xlane.f32.xlu0 %v53
  %v55 = vpop.xlane.xlu0 %54
  %v56 = vsel %vm46, %v17, 0.0
  %57 = vadd.xlane.f32.xlu0 %v56
  %v58 = vpop.xlane.xlu0 %57
  %v59 = vsel %vm46, %v18, 0.0
  %60 = vadd.xlane.f32.xlu0 %v59
  %v61 = vpop.xlane.xlu0 %60
  %v62 = vsel %vm46, %v19, 0.0
  %63 = vadd.xlane.f32.xlu0 %v62
  %v64 = vpop.xlane.xlu0 %63
  %v65 = vsel %vm46, %v20, 0.0
  %66 = vadd.xlane.f32.xlu0 %v65
  %v67 = vpop.xlane.xlu0 %66
  %v68 = vsel %vm46, %v21, 0.0
  %69 = vadd.xlane.f32.xlu0 %v68
  %v70 = vpop.xlane.xlu0 %69
  %v71 = vsel %vm46, %v22, 0.0
  %72 = vadd.xlane.f32.xlu0 %v71
  %v73 = vpop.xlane.xlu0 %72
  %v74 = vsel %vm46, %v23, 0.0
  %75 = vadd.xlane.f32.xlu0 %v74
  %v76 = vpop.xlane.xlu0 %75
  %v77 = vsel %vm46, %v24, 0.0
  %78 = vadd.xlane.f32.xlu0 %v77
  %v79 = vpop.xlane.xlu0 %78
  %v80 = vsel %vm46, %v25, 0.0
  %81 = vadd.xlane.f32.xlu0 %v80
  %v82 = vpop.xlane.xlu0 %81
  %v83 = vsel %vm46, %v26, 0.0
  %84 = vadd.xlane.f32.xlu0 %v83
  %v85 = vpop.xlane.xlu0 %84
  %v86 = vsel %vm46, %v27, 0.0
  %87 = vadd.xlane.f32.xlu0 %v86
  %v88 = vpop.xlane.xlu0 %87
  %v89 = vsel %vm46, %v28, 0.0
  %90 = vadd.xlane.f32.xlu0 %v89
  %v91 = vpop.xlane.xlu0 %90
  %v92 = vsel %vm46, %v29, 0.0
  %93 = vadd.xlane.f32.xlu0 %v92
  %v94 = vpop.xlane.xlu0 %93
  %v95 = vsel %vm46, %v30, 0.0
  %96 = vadd.xlane.f32.xlu0 %v95
  %v97 = vpop.xlane.xlu0 %96
  %v98 = vsel %vm46, %v31, 0.0
  %99 = vadd.xlane.f32.xlu0 %v98
  %v100 = vpop.xlane.xlu0 %99
  %v101 = vsel %vm46, %v32, 0.0
  %102 = vadd.xlane.f32.xlu0 %v101
  %v103 = vpop.xlane.xlu0 %102
  %v104 = vsel %vm46, %v33, 0.0
  %105 = vadd.xlane.f32.xlu0 %v104
  %v106 = vpop.xlane.xlu0 %105
  %v107 = vsel %vm46, %v34, 0.0
  %108 = vadd.xlane.f32.xlu0 %v107
  %v109 = vpop.xlane.xlu0 %108
  %v110 = vsel %vm46, %v35, 0.0
  %111 = vadd.xlane.f32.xlu0 %v110
  %v112 = vpop.xlane.xlu0 %111
  %v113 = vsel %vm46, %v36, 0.0
  %114 = vadd.xlane.f32.xlu0 %v113
  %v115 = vpop.xlane.xlu0 %114
  %v116 = vsel %vm46, %v37, 0.0
  %117 = vadd.xlane.f32.xlu0 %v116
  %v118 = vpop.xlane.xlu0 %117
  %v119 = vsel %vm46, %v38, 0.0
  %120 = vadd.xlane.f32.xlu0 %v119
  %v121 = vpop.xlane.xlu0 %120
  %v122 = vsel %vm46, %v39, 0.0
  %123 = vadd.xlane.f32.xlu0 %v122
  %v124 = vpop.xlane.xlu0 %123
  %v125 = vsel %vm46, %v40, 0.0
  %126 = vadd.xlane.f32.xlu0 %v125
  %v127 = vpop.xlane.xlu0 %126
  %v128 = vsel %vm46, %v41, 0.0
  %129 = vadd.xlane.f32.xlu0 %v128
  %v130 = vpop.xlane.xlu0 %129
  %v131 = vsel %vm46, %v42, 0.0
  %132 = vadd.xlane.f32.xlu0 %v131
  %v133 = vpop.xlane.xlu0 %132
  %v134 = vsel %vm46, %v43, 0.0
  %135 = vadd.xlane.f32.xlu0 %v134
  %v136 = vpop.xlane.xlu0 %135
  %v137 = vsel %vm46, %v44, 0.0
  %138 = vadd.xlane.f32.xlu0 %v137
  %v139 = vpop.xlane.xlu0 %138
  %v140 = vsel %vm46, %v45, 0.0
  %141 = vadd.xlane.f32.xlu0 %v140
  %v142 = vpop.xlane.xlu0 %141
  %v143 = vadd.f32 %v49, 0.0
  %v144 = vadd.f32 %v52, 0.0
  %v145 = vadd.f32 %v55, 0.0
  %v146 = vadd.f32 %v58, 0.0
  %v147 = vadd.f32 %v61, 0.0
  %v148 = vadd.f32 %v64, 0.0
  %v149 = vadd.f32 %v67, 0.0
  %v150 = vadd.f32 %v70, 0.0
  %v151 = vadd.f32 %v73, 0.0
  %v152 = vadd.f32 %v76, 0.0
  %v153 = vadd.f32 %v79, 0.0
  %v154 = vadd.f32 %v82, 0.0
  %v155 = vadd.f32 %v85, 0.0
  %v156 = vadd.f32 %v88, 0.0
  %v157 = vadd.f32 %v91, 0.0
  %v158 = vadd.f32 %v94, 0.0
  %v159 = vadd.f32 %v97, 0.0
  %v160 = vadd.f32 %v100, 0.0
  %v161 = vadd.f32 %v103, 0.0
  %v162 = vadd.f32 %v106, 0.0
  %v163 = vadd.f32 %v109, 0.0
  %v164 = vadd.f32 %v112, 0.0
  %v165 = vadd.f32 %v115, 0.0
  %v166 = vadd.f32 %v118, 0.0
  %v167 = vadd.f32 %v121, 0.0
  %v168 = vadd.f32 %v124, 0.0
  %v169 = vadd.f32 %v127, 0.0
  %v170 = vadd.f32 %v130, 0.0
  %v171 = vadd.f32 %v133, 0.0
  %v172 = vadd.f32 %v136, 0.0
  %v173 = vadd.f32 %v139, 0.0
  %v174 = vadd.f32 %v142, 0.0
  %v175 = vmul.f32 %v14, %v14
  %v176 = vmul.f32 %v15, %v15
  %v177 = vmul.f32 %v16, %v16
  %v178 = vmul.f32 %v17, %v17
  %v179 = vmul.f32 %v18, %v18
  %v180 = vmul.f32 %v19, %v19
  %v181 = vmul.f32 %v20, %v20
  %v182 = vmul.f32 %v21, %v21
  %v183 = vmul.f32 %v22, %v22
  %v184 = vmul.f32 %v23, %v23
  %v185 = vmul.f32 %v24, %v24
  %v186 = vmul.f32 %v25, %v25
  %v187 = vmul.f32 %v26, %v26
  %v188 = vmul.f32 %v27, %v27
  %v189 = vmul.f32 %v28, %v28
  %v190 = vmul.f32 %v29, %v29
  %v191 = vmul.f32 %v30, %v30
  %v192 = vmul.f32 %v31, %v31
  %v193 = vmul.f32 %v32, %v32
  %v194 = vmul.f32 %v33, %v33
  %v195 = vmul.f32 %v34, %v34
  %v196 = vmul.f32 %v35, %v35
  %v197 = vmul.f32 %v36, %v36
  %v198 = vmul.f32 %v37, %v37
  %v199 = vmul.f32 %v38, %v38
  %v200 = vmul.f32 %v39, %v39
  %v201 = vmul.f32 %v40, %v40
  %v202 = vmul.f32 %v41, %v41
  %v203 = vmul.f32 %v42, %v42
  %v204 = vmul.f32 %v43, %v43
  %v205 = vmul.f32 %v44, %v44
  %v206 = vmul.f32 %v45, %v45
  %v207 = vsel %vm46, %v175, 0.0
  %208 = vadd.xlane.f32.xlu0 %v207
  %v209 = vpop.xlane.xlu0 %208
  %v210 = vsel %vm46, %v176, 0.0
  %211 = vadd.xlane.f32.xlu0 %v210
  %v212 = vpop.xlane.xlu0 %211
  %v213 = vsel %vm46, %v177, 0.0
  %214 = vadd.xlane.f32.xlu0 %v213
  %v215 = vpop.xlane.xlu0 %214
  %v216 = vsel %vm46, %v178, 0.0
  %217 = vadd.xlane.f32.xlu0 %v216
  %v218 = vpop.xlane.xlu0 %217
  %v219 = vsel %vm46, %v179, 0.0
  %220 = vadd.xlane.f32.xlu0 %v219
  %v221 = vpop.xlane.xlu0 %220
  %v222 = vsel %vm46, %v180, 0.0
  %223 = vadd.xlane.f32.xlu0 %v222
  %v224 = vpop.xlane.xlu0 %223
  %v225 = vsel %vm46, %v181, 0.0
  %226 = vadd.xlane.f32.xlu0 %v225
  %v227 = vpop.xlane.xlu0 %226
  %v228 = vsel %vm46, %v182, 0.0
  %229 = vadd.xlane.f32.xlu0 %v228
  %v230 = vpop.xlane.xlu0 %229
  %v231 = vsel %vm46, %v183, 0.0
  %232 = vadd.xlane.f32.xlu0 %v231
  %v233 = vpop.xlane.xlu0 %232
  %v234 = vsel %vm46, %v184, 0.0
  %235 = vadd.xlane.f32.xlu0 %v234
  %v236 = vpop.xlane.xlu0 %235
  %v237 = vsel %vm46, %v185, 0.0
  %238 = vadd.xlane.f32.xlu0 %v237
  %v239 = vpop.xlane.xlu0 %238
  %v240 = vsel %vm46, %v186, 0.0
  %241 = vadd.xlane.f32.xlu0 %v240
  %v242 = vpop.xlane.xlu0 %241
  %v243 = vsel %vm46, %v187, 0.0
  %244 = vadd.xlane.f32.xlu0 %v243
  %v245 = vpop.xlane.xlu0 %244
  %v246 = vsel %vm46, %v188, 0.0
  %247 = vadd.xlane.f32.xlu0 %v246
  %v248 = vpop.xlane.xlu0 %247
  %v249 = vsel %vm46, %v189, 0.0
  %250 = vadd.xlane.f32.xlu0 %v249
  %v251 = vpop.xlane.xlu0 %250
  %v252 = vsel %vm46, %v190, 0.0
  %253 = vadd.xlane.f32.xlu0 %v252
  %v254 = vpop.xlane.xlu0 %253
  %v255 = vsel %vm46, %v191, 0.0
  %256 = vadd.xlane.f32.xlu0 %v255
  %v257 = vpop.xlane.xlu0 %256
  %v258 = vsel %vm46, %v192, 0.0
  %259 = vadd.xlane.f32.xlu0 %v258
  %v260 = vpop.xlane.xlu0 %259
  %v261 = vsel %vm46, %v193, 0.0
  %262 = vadd.xlane.f32.xlu0 %v261
  %v263 = vpop.xlane.xlu0 %262
  %v264 = vsel %vm46, %v194, 0.0
  %265 = vadd.xlane.f32.xlu0 %v264
  %v266 = vpop.xlane.xlu0 %265
  %v267 = vsel %vm46, %v195, 0.0
  %268 = vadd.xlane.f32.xlu0 %v267
  %v269 = vpop.xlane.xlu0 %268
  %v270 = vsel %vm46, %v196, 0.0
  %271 = vadd.xlane.f32.xlu0 %v270
  %v272 = vpop.xlane.xlu0 %271
  %v273 = vsel %vm46, %v197, 0.0
  %274 = vadd.xlane.f32.xlu0 %v273
  %v275 = vpop.xlane.xlu0 %274
  %v276 = vsel %vm46, %v198, 0.0
  %277 = vadd.xlane.f32.xlu0 %v276
  %v278 = vpop.xlane.xlu0 %277
  %v279 = vsel %vm46, %v199, 0.0
  %280 = vadd.xlane.f32.xlu0 %v279
  %v281 = vpop.xlane.xlu0 %280
  %v282 = vsel %vm46, %v200, 0.0
  %283 = vadd.xlane.f32.xlu0 %v282
  %v284 = vpop.xlane.xlu0 %283
  %v285 = vsel %vm46, %v201, 0.0
  %286 = vadd.xlane.f32.xlu0 %v285
  %v287 = vpop.xlane.xlu0 %286
  %v288 = vsel %vm46, %v202, 0.0
  %289 = vadd.xlane.f32.xlu0 %v288
  %v290 = vpop.xlane.xlu0 %289
  %v291 = vsel %vm46, %v203, 0.0
  %292 = vadd.xlane.f32.xlu0 %v291
  %v293 = vpop.xlane.xlu0 %292
  %v294 = vsel %vm46, %v204, 0.0
  %295 = vadd.xlane.f32.xlu0 %v294
  %v296 = vpop.xlane.xlu0 %295
  %v297 = vsel %vm46, %v205, 0.0
  %298 = vadd.xlane.f32.xlu0 %v297
  %v299 = vpop.xlane.xlu0 %298
  %v300 = vsel %vm46, %v206, 0.0
  %301 = vadd.xlane.f32.xlu0 %v300
  %v302 = vpop.xlane.xlu0 %301
  %v303 = vadd.f32 %v209, 0.0
  %v304 = vadd.f32 %v212, 0.0
  %v305 = vadd.f32 %v215, 0.0
  %v306 = vadd.f32 %v218, 0.0
  %v307 = vadd.f32 %v221, 0.0
  %v308 = vadd.f32 %v224, 0.0
  %v309 = vadd.f32 %v227, 0.0
  %v310 = vadd.f32 %v230, 0.0
  %v311 = vadd.f32 %v233, 0.0
  %v312 = vadd.f32 %v236, 0.0
  %v313 = vadd.f32 %v239, 0.0
  %v314 = vadd.f32 %v242, 0.0
  %v315 = vadd.f32 %v245, 0.0
  %v316 = vadd.f32 %v248, 0.0
  %v317 = vadd.f32 %v251, 0.0
  %v318 = vadd.f32 %v254, 0.0
  %v319 = vadd.f32 %v257, 0.0
  %v320 = vadd.f32 %v260, 0.0
  %v321 = vadd.f32 %v263, 0.0
  %v322 = vadd.f32 %v266, 0.0
  %v323 = vadd.f32 %v269, 0.0
  %v324 = vadd.f32 %v272, 0.0
  %v325 = vadd.f32 %v275, 0.0
  %v326 = vadd.f32 %v278, 0.0
  %v327 = vadd.f32 %v281, 0.0
  %v328 = vadd.f32 %v284, 0.0
  %v329 = vadd.f32 %v287, 0.0
  %v330 = vadd.f32 %v290, 0.0
  %v331 = vadd.f32 %v293, 0.0
  %v332 = vadd.f32 %v296, 0.0
  %v333 = vadd.f32 %v299, 0.0
  %v334 = vadd.f32 %v302, 0.0
  %v335 = vmul.f32 %v143, 0.020408163
  %v336 = vmul.f32 %v144, 0.020408163
  %v337 = vmul.f32 %v145, 0.020408163
  %v338 = vmul.f32 %v146, 0.020408163
  %v339 = vmul.f32 %v147, 0.020408163
  %v340 = vmul.f32 %v148, 0.020408163
  %v341 = vmul.f32 %v149, 0.020408163
  %v342 = vmul.f32 %v150, 0.020408163
  %v343 = vmul.f32 %v151, 0.020408163
  %v344 = vmul.f32 %v152, 0.020408163
  %v345 = vmul.f32 %v153, 0.020408163
  %v346 = vmul.f32 %v154, 0.020408163
  %v347 = vmul.f32 %v155, 0.020408163
  %v348 = vmul.f32 %v156, 0.020408163
  %v349 = vmul.f32 %v157, 0.020408163
  %v350 = vmul.f32 %v158, 0.020408163
  %v351 = vmul.f32 %v159, 0.020408163
  %v352 = vmul.f32 %v160, 0.020408163
  %v353 = vmul.f32 %v161, 0.020408163
  %v354 = vmul.f32 %v162, 0.020408163
  %v355 = vmul.f32 %v163, 0.020408163
  %v356 = vmul.f32 %v164, 0.020408163
  %v357 = vmul.f32 %v165, 0.020408163
  %v358 = vmul.f32 %v166, 0.020408163
  %v359 = vmul.f32 %v167, 0.020408163
  %v360 = vmul.f32 %v168, 0.020408163
  %v361 = vmul.f32 %v169, 0.020408163
  %v362 = vmul.f32 %v170, 0.020408163
  %v363 = vmul.f32 %v171, 0.020408163
  %v364 = vmul.f32 %v172, 0.020408163
  %v365 = vmul.f32 %v173, 0.020408163
  %v366 = vmul.f32 %v174, 0.020408163
  %v367 = vmul.f32 %v303, 0.020408163
  %v368 = vmul.f32 %v304, 0.020408163
  %v369 = vmul.f32 %v305, 0.020408163
  %v370 = vmul.f32 %v306, 0.020408163
  %v371 = vmul.f32 %v307, 0.020408163
  %v372 = vmul.f32 %v308, 0.020408163
  %v373 = vmul.f32 %v309, 0.020408163
  %v374 = vmul.f32 %v310, 0.020408163
  %v375 = vmul.f32 %v311, 0.020408163
  %v376 = vmul.f32 %v312, 0.020408163
  %v377 = vmul.f32 %v313, 0.020408163
  %v378 = vmul.f32 %v314, 0.020408163
  %v379 = vmul.f32 %v315, 0.020408163
  %v380 = vmul.f32 %v316, 0.020408163
  %v381 = vmul.f32 %v317, 0.020408163
  %v382 = vmul.f32 %v318, 0.020408163
  %v383 = vmul.f32 %v319, 0.020408163
  %v384 = vmul.f32 %v320, 0.020408163
  %v385 = vmul.f32 %v321, 0.020408163
  %v386 = vmul.f32 %v322, 0.020408163
  %v387 = vmul.f32 %v323, 0.020408163
  %v388 = vmul.f32 %v324, 0.020408163
  %v389 = vmul.f32 %v325, 0.020408163
  %v390 = vmul.f32 %v326, 0.020408163
  %v391 = vmul.f32 %v327, 0.020408163
  %v392 = vmul.f32 %v328, 0.020408163
  %v393 = vmul.f32 %v329, 0.020408163
  %v394 = vmul.f32 %v330, 0.020408163
  %v395 = vmul.f32 %v331, 0.020408163
  %v396 = vmul.f32 %v332, 0.020408163
  %v397 = vmul.f32 %v333, 0.020408163
  %v398 = vmul.f32 %v334, 0.020408163
  %v399 = vmul.f32 %v335, %v335
  %v400 = vmul.f32 %v336, %v336
  %v401 = vmul.f32 %v337, %v337
  %v402 = vmul.f32 %v338, %v338
  %v403 = vmul.f32 %v339, %v339
  %v404 = vmul.f32 %v340, %v340
  %v405 = vmul.f32 %v341, %v341
  %v406 = vmul.f32 %v342, %v342
  %v407 = vmul.f32 %v343, %v343
  %v408 = vmul.f32 %v344, %v344
  %v409 = vmul.f32 %v345, %v345
  %v410 = vmul.f32 %v346, %v346
  %v411 = vmul.f32 %v347, %v347
  %v412 = vmul.f32 %v348, %v348
  %v413 = vmul.f32 %v349, %v349
  %v414 = vmul.f32 %v350, %v350
  %v415 = vmul.f32 %v351, %v351
  %v416 = vmul.f32 %v352, %v352
  %v417 = vmul.f32 %v353, %v353
  %v418 = vmul.f32 %v354, %v354
  %v419 = vmul.f32 %v355, %v355
  %v420 = vmul.f32 %v356, %v356
  %v421 = vmul.f32 %v357, %v357
  %v422 = vmul.f32 %v358, %v358
  %v423 = vmul.f32 %v359, %v359
  %v424 = vmul.f32 %v360, %v360
  %v425 = vmul.f32 %v361, %v361
  %v426 = vmul.f32 %v362, %v362
  %v427 = vmul.f32 %v363, %v363
  %v428 = vmul.f32 %v364, %v364
  %v429 = vmul.f32 %v365, %v365
  %v430 = vmul.f32 %v366, %v366
  %v431 = vsub.f32 %v367, %v399
  %v432 = vsub.f32 %v368, %v400
  %v433 = vsub.f32 %v369, %v401
  %v434 = vsub.f32 %v370, %v402
  %v435 = vsub.f32 %v371, %v403
  %v436 = vsub.f32 %v372, %v404
  %v437 = vsub.f32 %v373, %v405
  %v438 = vsub.f32 %v374, %v406
  %v439 = vsub.f32 %v375, %v407
  %v440 = vsub.f32 %v376, %v408
  %v441 = vsub.f32 %v377, %v409
  %v442 = vsub.f32 %v378, %v410
  %v443 = vsub.f32 %v379, %v411
  %v444 = vsub.f32 %v380, %v412
  %v445 = vsub.f32 %v381, %v413
  %v446 = vsub.f32 %v382, %v414
  %v447 = vsub.f32 %v383, %v415
  %v448 = vsub.f32 %v384, %v416
  %v449 = vsub.f32 %v385, %v417
  %v450 = vsub.f32 %v386, %v418
  %v451 = vsub.f32 %v387, %v419
  %v452 = vsub.f32 %v388, %v420
  %v453 = vsub.f32 %v389, %v421
  %v454 = vsub.f32 %v390, %v422
  %v455 = vsub.f32 %v391, %v423
  %v456 = vsub.f32 %v392, %v424
  %v457 = vsub.f32 %v393, %v425
  %v458 = vsub.f32 %v394, %v426
  %v459 = vsub.f32 %v395, %v427
  %v460 = vsub.f32 %v396, %v428
  %v461 = vsub.f32 %v397, %v429
  %v462 = vsub.f32 %v398, %v430
  %v463 = vadd.f32 %v431, 0.001
  %v464 = vadd.f32 %v432, 0.001
  %v465 = vadd.f32 %v433, 0.001
  %v466 = vadd.f32 %v434, 0.001
  %v467 = vadd.f32 %v435, 0.001
  %v468 = vadd.f32 %v436, 0.001
  %v469 = vadd.f32 %v437, 0.001
  %v470 = vadd.f32 %v438, 0.001
  %v471 = vadd.f32 %v439, 0.001
  %v472 = vadd.f32 %v440, 0.001
  %v473 = vadd.f32 %v441, 0.001
  %v474 = vadd.f32 %v442, 0.001
  %v475 = vadd.f32 %v443, 0.001
  %v476 = vadd.f32 %v444, 0.001
  %v477 = vadd.f32 %v445, 0.001
  %v478 = vadd.f32 %v446, 0.001
  %v479 = vadd.f32 %v447, 0.001
  %v480 = vadd.f32 %v448, 0.001
  %v481 = vadd.f32 %v449, 0.001
  %v482 = vadd.f32 %v450, 0.001
  %v483 = vadd.f32 %v451, 0.001
  %v484 = vadd.f32 %v452, 0.001
  %v485 = vadd.f32 %v453, 0.001
  %v486 = vadd.f32 %v454, 0.001
  %v487 = vadd.f32 %v455, 0.001
  %v488 = vadd.f32 %v456, 0.001
  %v489 = vadd.f32 %v457, 0.001
  %v490 = vadd.f32 %v458, 0.001
  %v491 = vadd.f32 %v459, 0.001
  %v492 = vadd.f32 %v460, 0.001
  %v493 = vadd.f32 %v461, 0.001
  %v494 = vadd.f32 %v462, 0.001
  %v495 = vrsqrt.pop %v463
  %v496 = vrsqrt.pop %v464
  %v497 = vrsqrt.pop %v465
  %v498 = vrsqrt.pop %v466
  %v499 = vrsqrt.pop %v467
  %v500 = vrsqrt.pop %v468
  %v501 = vrsqrt.pop %v469
  %v502 = vrsqrt.pop %v470
  %v503 = vrsqrt.pop %v471
  %v504 = vrsqrt.pop %v472
  %v505 = vrsqrt.pop %v473
  %v506 = vrsqrt.pop %v474
  %v507 = vrsqrt.pop %v475
  %v508 = vrsqrt.pop %v476
  %v509 = vrsqrt.pop %v477
  %v510 = vrsqrt.pop %v478
  %v511 = vrsqrt.pop %v479
  %v512 = vrsqrt.pop %v480
  %v513 = vrsqrt.pop %v481
  %v514 = vrsqrt.pop %v482
  %v515 = vrsqrt.pop %v483
  %v516 = vrsqrt.pop %v484
  %v517 = vrsqrt.pop %v485
  %v518 = vrsqrt.pop %v486
  %v519 = vrsqrt.pop %v487
  %v520 = vrsqrt.pop %v488
  %v521 = vrsqrt.pop %v489
  %v522 = vrsqrt.pop %v490
  %v523 = vrsqrt.pop %v491
  %v524 = vrsqrt.pop %v492
  %v525 = vrsqrt.pop %v493
  %v526 = vrsqrt.pop %v494
  %v527 = vld [vmem:[%s1] sm:$0xff]
  %v528 = vld [vmem:[%s1 + $0x8] sm:$0xff]
  %v529 = vld [vmem:[%s1 + $0x10] sm:$0xff]
  %v530 = vld [vmem:[%s1 + $0x18] sm:$0xff]
  %v531 = vld [vmem:[%s1 + $0x20] sm:$0xff]
  %v532 = vld [vmem:[%s1 + $0x28] sm:$0xff]
  %v533 = vld [vmem:[%s1 + $0x30] sm:$0xff]
  %v534 = vld [vmem:[%s1 + $0x38] sm:$0xff]
  %v535 = vld [vmem:[%s1 + $0x40] sm:$0xff]
  %v536 = vld [vmem:[%s1 + $0x48] sm:$0xff]
  %v537 = vld [vmem:[%s1 + $0x50] sm:$0xff]
  %v538 = vld [vmem:[%s1 + $0x58] sm:$0xff]
  %v539 = vld [vmem:[%s1 + $0x60] sm:$0xff]
  %v540 = vld [vmem:[%s1 + $0x68] sm:$0xff]
  %v541 = vld [vmem:[%s1 + $0x70] sm:$0xff]
  %v542 = vld [vmem:[%s1 + $0x78] sm:$0xff]
  %v543 = vld [vmem:[%s1 + $0x80] sm:$0xff]
  %v544 = vld [vmem:[%s1 + $0x88] sm:$0xff]
  %v545 = vld [vmem:[%s1 + $0x90] sm:$0xff]
  %v546 = vld [vmem:[%s1 + $0x98] sm:$0xff]
  %v547 = vld [vmem:[%s1 + $0xa0] sm:$0xff]
  %v548 = vld [vmem:[%s1 + $0xa8] sm:$0xff]
  %v549 = vld [vmem:[%s1 + $0xb0] sm:$0xff]
  %v550 = vld [vmem:[%s1 + $0xb8] sm:$0xff]
  %v551 = vld [vmem:[%s1 + $0xc0] sm:$0xff]
  %v552 = vld [vmem:[%s1 + $0xc8] sm:$0xff]
  %v553 = vld [vmem:[%s1 + $0xd0] sm:$0xff]
  %v554 = vld [vmem:[%s1 + $0xd8] sm:$0xff]
  %v555 = vld [vmem:[%s1 + $0xe0] sm:$0xff]
  %v556 = vld [vmem:[%s1 + $0xe8] sm:$0xff]
  %v557 = vld [vmem:[%s1 + $0xf0] sm:$0xff]
  %v558 = vld [vmem:[%s1 + $0xf8] sm:$0xff]
  %v559 = vmul.f32 %v527, %v495
  %v560 = vmul.f32 %v528, %v496
  %v561 = vmul.f32 %v529, %v497
  %v562 = vmul.f32 %v530, %v498
  %v563 = vmul.f32 %v531, %v499
  %v564 = vmul.f32 %v532, %v500
  %v565 = vmul.f32 %v533, %v501
  %v566 = vmul.f32 %v534, %v502
  %v567 = vmul.f32 %v535, %v503
  %v568 = vmul.f32 %v536, %v504
  %v569 = vmul.f32 %v537, %v505
  %v570 = vmul.f32 %v538, %v506
  %v571 = vmul.f32 %v539, %v507
  %v572 = vmul.f32 %v540, %v508
  %v573 = vmul.f32 %v541, %v509
  %v574 = vmul.f32 %v542, %v510
  %v575 = vmul.f32 %v543, %v511
  %v576 = vmul.f32 %v544, %v512
  %v577 = vmul.f32 %v545, %v513
  %v578 = vmul.f32 %v546, %v514
  %v579 = vmul.f32 %v547, %v515
  %v580 = vmul.f32 %v548, %v516
  %v581 = vmul.f32 %v549, %v517
  %v582 = vmul.f32 %v550, %v518
  %v583 = vmul.f32 %v551, %v519
  %v584 = vmul.f32 %v552, %v520
  %v585 = vmul.f32 %v553, %v521
  %v586 = vmul.f32 %v554, %v522
  %v587 = vmul.f32 %v555, %v523
  %v588 = vmul.f32 %v556, %v524
  %v589 = vmul.f32 %v557, %v525
  %v590 = vmul.f32 %v558, %v526
  %v591 = vld [vmem:[%s2] sm:$0xff]
  %v592 = vld [vmem:[%s2 + $0x8] sm:$0xff]
  %v593 = vld [vmem:[%s2 + $0x10] sm:$0xff]
  %v594 = vld [vmem:[%s2 + $0x18] sm:$0xff]
  %v595 = vld [vmem:[%s2 + $0x20] sm:$0xff]
  %v596 = vld [vmem:[%s2 + $0x28] sm:$0xff]
  %v597 = vld [vmem:[%s2 + $0x30] sm:$0xff]
  %v598 = vld [vmem:[%s2 + $0x38] sm:$0xff]
  %v599 = vld [vmem:[%s2 + $0x40] sm:$0xff]
  %v600 = vld [vmem:[%s2 + $0x48] sm:$0xff]
  %v601 = vld [vmem:[%s2 + $0x50] sm:$0xff]
  %v602 = vld [vmem:[%s2 + $0x58] sm:$0xff]
  %v603 = vld [vmem:[%s2 + $0x60] sm:$0xff]
  %v604 = vld [vmem:[%s2 + $0x68] sm:$0xff]
  %v605 = vld [vmem:[%s2 + $0x70] sm:$0xff]
  %v606 = vld [vmem:[%s2 + $0x78] sm:$0xff]
  %v607 = vld [vmem:[%s2 + $0x80] sm:$0xff]
  %v608 = vld [vmem:[%s2 + $0x88] sm:$0xff]
  %v609 = vld [vmem:[%s2 + $0x90] sm:$0xff]
  %v610 = vld [vmem:[%s2 + $0x98] sm:$0xff]
  %v611 = vld [vmem:[%s2 + $0xa0] sm:$0xff]
  %v612 = vld [vmem:[%s2 + $0xa8] sm:$0xff]
  %v613 = vld [vmem:[%s2 + $0xb0] sm:$0xff]
  %v614 = vld [vmem:[%s2 + $0xb8] sm:$0xff]
  %v615 = vld [vmem:[%s2 + $0xc0] sm:$0xff]
  %v616 = vld [vmem:[%s2 + $0xc8] sm:$0xff]
  %v617 = vld [vmem:[%s2 + $0xd0] sm:$0xff]
  %v618 = vld [vmem:[%s2 + $0xd8] sm:$0xff]
  %v619 = vld [vmem:[%s2 + $0xe0] sm:$0xff]
  %v620 = vld [vmem:[%s2 + $0xe8] sm:$0xff]
  %v621 = vld [vmem:[%s2 + $0xf0] sm:$0xff]
  %v622 = vld [vmem:[%s2 + $0xf8] sm:$0xff]
  %v623 = vmul.f32 %v335, %v559
  %v624 = vmul.f32 %v336, %v560
  %v625 = vmul.f32 %v337, %v561
  %v626 = vmul.f32 %v338, %v562
  %v627 = vmul.f32 %v339, %v563
  %v628 = vmul.f32 %v340, %v564
  %v629 = vmul.f32 %v341, %v565
  %v630 = vmul.f32 %v342, %v566
  %v631 = vmul.f32 %v343, %v567
  %v632 = vmul.f32 %v344, %v568
  %v633 = vmul.f32 %v345, %v569
  %v634 = vmul.f32 %v346, %v570
  %v635 = vmul.f32 %v347, %v571
  %v636 = vmul.f32 %v348, %v572
  %v637 = vmul.f32 %v349, %v573
  %v638 = vmul.f32 %v350, %v574
  %v639 = vmul.f32 %v351, %v575
  %v640 = vmul.f32 %v352, %v576
  %v641 = vmul.f32 %v353, %v577
  %v642 = vmul.f32 %v354, %v578
  %v643 = vmul.f32 %v355, %v579
  %v644 = vmul.f32 %v356, %v580
  %v645 = vmul.f32 %v357, %v581
  %v646 = vmul.f32 %v358, %v582
  %v647 = vmul.f32 %v359, %v583
  %v648 = vmul.f32 %v360, %v584
  %v649 = vmul.f32 %v361, %v585
  %v650 = vmul.f32 %v362, %v586
  %v651 = vmul.f32 %v363, %v587
  %v652 = vmul.f32 %v364, %v588
  %v653 = vmul.f32 %v365, %v589
  %v654 = vmul.f32 %v366, %v590
  %v655 = vsub.f32 %v591, %v623
  %v656 = vsub.f32 %v592, %v624
  %v657 = vsub.f32 %v593, %v625
  %v658 = vsub.f32 %v594, %v626
  %v659 = vsub.f32 %v595, %v627
  %v660 = vsub.f32 %v596, %v628
  %v661 = vsub.f32 %v597, %v629
  %v662 = vsub.f32 %v598, %v630
  %v663 = vsub.f32 %v599, %v631
  %v664 = vsub.f32 %v600, %v632
  %v665 = vsub.f32 %v601, %v633
  %v666 = vsub.f32 %v602, %v634
  %v667 = vsub.f32 %v603, %v635
  %v668 = vsub.f32 %v604, %v636
  %v669 = vsub.f32 %v605, %v637
  %v670 = vsub.f32 %v606, %v638
  %v671 = vsub.f32 %v607, %v639
  %v672 = vsub.f32 %v608, %v640
  %v673 = vsub.f32 %v609, %v641
  %v674 = vsub.f32 %v610, %v642
  %v675 = vsub.f32 %v611, %v643
  %v676 = vsub.f32 %v612, %v644
  %v677 = vsub.f32 %v613, %v645
  %v678 = vsub.f32 %v614, %v646
  %v679 = vsub.f32 %v615, %v647
  %v680 = vsub.f32 %v616, %v648
  %v681 = vsub.f32 %v617, %v649
  %v682 = vsub.f32 %v618, %v650
  %v683 = vsub.f32 %v619, %v651
  %v684 = vsub.f32 %v620, %v652
  %v685 = vsub.f32 %v621, %v653
  %v686 = vsub.f32 %v622, %v654
  %688 = vset.pattern.permute.xlu0 0
  %689 = vperm.xlu0 %688, %v559
  %v690 = vpop.permute.xlu0 %689
  %693 = vset.pattern.permute.xlu0 0
  %694 = vperm.xlu0 %693, %v560
  %v695 = vpop.permute.xlu0 %694
  %698 = vset.pattern.permute.xlu0 0
  %699 = vperm.xlu0 %698, %v561
  %v700 = vpop.permute.xlu0 %699
  %703 = vset.pattern.permute.xlu0 0
  %704 = vperm.xlu0 %703, %v562
  %v705 = vpop.permute.xlu0 %704
  %708 = vset.pattern.permute.xlu0 0
  %709 = vperm.xlu0 %708, %v563
  %v710 = vpop.permute.xlu0 %709
  %713 = vset.pattern.permute.xlu0 0
  %714 = vperm.xlu0 %713, %v564
  %v715 = vpop.permute.xlu0 %714
  %718 = vset.pattern.permute.xlu0 0
  %719 = vperm.xlu0 %718, %v565
  %v720 = vpop.permute.xlu0 %719
  %723 = vset.pattern.permute.xlu0 0
  %724 = vperm.xlu0 %723, %v566
  %v725 = vpop.permute.xlu0 %724
  %728 = vset.pattern.permute.xlu0 0
  %729 = vperm.xlu0 %728, %v567
  %v730 = vpop.permute.xlu0 %729
  %733 = vset.pattern.permute.xlu0 0
  %734 = vperm.xlu0 %733, %v568
  %v735 = vpop.permute.xlu0 %734
  %738 = vset.pattern.permute.xlu0 0
  %739 = vperm.xlu0 %738, %v569
  %v740 = vpop.permute.xlu0 %739
  %743 = vset.pattern.permute.xlu0 0
  %744 = vperm.xlu0 %743, %v570
  %v745 = vpop.permute.xlu0 %744
  %748 = vset.pattern.permute.xlu0 0
  %749 = vperm.xlu0 %748, %v571
  %v750 = vpop.permute.xlu0 %749
  %753 = vset.pattern.permute.xlu0 0
  %754 = vperm.xlu0 %753, %v572
  %v755 = vpop.permute.xlu0 %754
  %758 = vset.pattern.permute.xlu0 0
  %759 = vperm.xlu0 %758, %v573
  %v760 = vpop.permute.xlu0 %759
  %763 = vset.pattern.permute.xlu0 0
  %764 = vperm.xlu0 %763, %v574
  %v765 = vpop.permute.xlu0 %764
  %768 = vset.pattern.permute.xlu0 0
  %769 = vperm.xlu0 %768, %v575
  %v770 = vpop.permute.xlu0 %769
  %773 = vset.pattern.permute.xlu0 0
  %774 = vperm.xlu0 %773, %v576
  %v775 = vpop.permute.xlu0 %774
  %778 = vset.pattern.permute.xlu0 0
  %779 = vperm.xlu0 %778, %v577
  %v780 = vpop.permute.xlu0 %779
  %783 = vset.pattern.permute.xlu0 0
  %784 = vperm.xlu0 %783, %v578
  %v785 = vpop.permute.xlu0 %784
  %788 = vset.pattern.permute.xlu0 0
  %789 = vperm.xlu0 %788, %v579
  %v790 = vpop.permute.xlu0 %789
  %793 = vset.pattern.permute.xlu0 0
  %794 = vperm.xlu0 %793, %v580
  %v795 = vpop.permute.xlu0 %794
  %798 = vset.pattern.permute.xlu0 0
  %799 = vperm.xlu0 %798, %v581
  %v800 = vpop.permute.xlu0 %799
  %803 = vset.pattern.permute.xlu0 0
  %804 = vperm.xlu0 %803, %v582
  %v805 = vpop.permute.xlu0 %804
  %808 = vset.pattern.permute.xlu0 0
  %809 = vperm.xlu0 %808, %v583
  %v810 = vpop.permute.xlu0 %809
  %813 = vset.pattern.permute.xlu0 0
  %814 = vperm.xlu0 %813, %v584
  %v815 = vpop.permute.xlu0 %814
  %818 = vset.pattern.permute.xlu0 0
  %819 = vperm.xlu0 %818, %v585
  %v820 = vpop.permute.xlu0 %819
  %823 = vset.pattern.permute.xlu0 0
  %824 = vperm.xlu0 %823, %v586
  %v825 = vpop.permute.xlu0 %824
  %828 = vset.pattern.permute.xlu0 0
  %829 = vperm.xlu0 %828, %v587
  %v830 = vpop.permute.xlu0 %829
  %833 = vset.pattern.permute.xlu0 0
  %834 = vperm.xlu0 %833, %v588
  %v835 = vpop.permute.xlu0 %834
  %838 = vset.pattern.permute.xlu0 0
  %839 = vperm.xlu0 %838, %v589
  %v840 = vpop.permute.xlu0 %839
  %843 = vset.pattern.permute.xlu0 0
  %844 = vperm.xlu0 %843, %v590
  %v845 = vpop.permute.xlu0 %844
  %v847 = vmul.f32 %v14, %v690
  %v848 = vmul.f32 %v15, %v695
  %v849 = vmul.f32 %v16, %v700
  %v850 = vmul.f32 %v17, %v705
  %v851 = vmul.f32 %v18, %v710
  %v852 = vmul.f32 %v19, %v715
  %v853 = vmul.f32 %v20, %v720
  %v854 = vmul.f32 %v21, %v725
  %v855 = vmul.f32 %v22, %v730
  %v856 = vmul.f32 %v23, %v735
  %v857 = vmul.f32 %v24, %v740
  %v858 = vmul.f32 %v25, %v745
  %v859 = vmul.f32 %v26, %v750
  %v860 = vmul.f32 %v27, %v755
  %v861 = vmul.f32 %v28, %v760
  %v862 = vmul.f32 %v29, %v765
  %v863 = vmul.f32 %v30, %v770
  %v864 = vmul.f32 %v31, %v775
  %v865 = vmul.f32 %v32, %v780
  %v866 = vmul.f32 %v33, %v785
  %v867 = vmul.f32 %v34, %v790
  %v868 = vmul.f32 %v35, %v795
  %v869 = vmul.f32 %v36, %v800
  %v870 = vmul.f32 %v37, %v805
  %v871 = vmul.f32 %v38, %v810
  %v872 = vmul.f32 %v39, %v815
  %v873 = vmul.f32 %v40, %v820
  %v874 = vmul.f32 %v41, %v825
  %v875 = vmul.f32 %v42, %v830
  %v876 = vmul.f32 %v43, %v835
  %v877 = vmul.f32 %v44, %v840
  %v878 = vmul.f32 %v45, %v845
  %880 = vset.pattern.permute.xlu0 0
  %881 = vperm.xlu0 %880, %v655
  %v882 = vpop.permute.xlu0 %881
  %885 = vset.pattern.permute.xlu0 0
  %886 = vperm.xlu0 %885, %v656
  %v887 = vpop.permute.xlu0 %886
  %890 = vset.pattern.permute.xlu0 0
  %891 = vperm.xlu0 %890, %v657
  %v892 = vpop.permute.xlu0 %891
  %895 = vset.pattern.permute.xlu0 0
  %896 = vperm.xlu0 %895, %v658
  %v897 = vpop.permute.xlu0 %896
  %900 = vset.pattern.permute.xlu0 0
  %901 = vperm.xlu0 %900, %v659
  %v902 = vpop.permute.xlu0 %901
  %905 = vset.pattern.permute.xlu0 0
  %906 = vperm.xlu0 %905, %v660
  %v907 = vpop.permute.xlu0 %906
  %910 = vset.pattern.permute.xlu0 0
  %911 = vperm.xlu0 %910, %v661
  %v912 = vpop.permute.xlu0 %911
  %915 = vset.pattern.permute.xlu0 0
  %916 = vperm.xlu0 %915, %v662
  %v917 = vpop.permute.xlu0 %916
  %920 = vset.pattern.permute.xlu0 0
  %921 = vperm.xlu0 %920, %v663
  %v922 = vpop.permute.xlu0 %921
  %925 = vset.pattern.permute.xlu0 0
  %926 = vperm.xlu0 %925, %v664
  %v927 = vpop.permute.xlu0 %926
  %930 = vset.pattern.permute.xlu0 0
  %931 = vperm.xlu0 %930, %v665
  %v932 = vpop.permute.xlu0 %931
  %935 = vset.pattern.permute.xlu0 0
  %936 = vperm.xlu0 %935, %v666
  %v937 = vpop.permute.xlu0 %936
  %940 = vset.pattern.permute.xlu0 0
  %941 = vperm.xlu0 %940, %v667
  %v942 = vpop.permute.xlu0 %941
  %945 = vset.pattern.permute.xlu0 0
  %946 = vperm.xlu0 %945, %v668
  %v947 = vpop.permute.xlu0 %946
  %950 = vset.pattern.permute.xlu0 0
  %951 = vperm.xlu0 %950, %v669
  %v952 = vpop.permute.xlu0 %951
  %955 = vset.pattern.permute.xlu0 0
  %956 = vperm.xlu0 %955, %v670
  %v957 = vpop.permute.xlu0 %956
  %960 = vset.pattern.permute.xlu0 0
  %961 = vperm.xlu0 %960, %v671
  %v962 = vpop.permute.xlu0 %961
  %965 = vset.pattern.permute.xlu0 0
  %966 = vperm.xlu0 %965, %v672
  %v967 = vpop.permute.xlu0 %966
  %970 = vset.pattern.permute.xlu0 0
  %971 = vperm.xlu0 %970, %v673
  %v972 = vpop.permute.xlu0 %971
  %975 = vset.pattern.permute.xlu0 0
  %976 = vperm.xlu0 %975, %v674
  %v977 = vpop.permute.xlu0 %976
  %980 = vset.pattern.permute.xlu0 0
  %981 = vperm.xlu0 %980, %v675
  %v982 = vpop.permute.xlu0 %981
  %985 = vset.pattern.permute.xlu0 0
  %986 = vperm.xlu0 %985, %v676
  %v987 = vpop.permute.xlu0 %986
  %990 = vset.pattern.permute.xlu0 0
  %991 = vperm.xlu0 %990, %v677
  %v992 = vpop.permute.xlu0 %991
  %995 = vset.pattern.permute.xlu0 0
  %996 = vperm.xlu0 %995, %v678
  %v997 = vpop.permute.xlu0 %996
  %1000 = vset.pattern.permute.xlu0 0
  %1001 = vperm.xlu0 %1000, %v679
  %v1002 = vpop.permute.xlu0 %1001
  %1005 = vset.pattern.permute.xlu0 0
  %1006 = vperm.xlu0 %1005, %v680
  %v1007 = vpop.permute.xlu0 %1006
  %1010 = vset.pattern.permute.xlu0 0
  %1011 = vperm.xlu0 %1010, %v681
  %v1012 = vpop.permute.xlu0 %1011
  %1015 = vset.pattern.permute.xlu0 0
  %1016 = vperm.xlu0 %1015, %v682
  %v1017 = vpop.permute.xlu0 %1016
  %1020 = vset.pattern.permute.xlu0 0
  %1021 = vperm.xlu0 %1020, %v683
  %v1022 = vpop.permute.xlu0 %1021
  %1025 = vset.pattern.permute.xlu0 0
  %1026 = vperm.xlu0 %1025, %v684
  %v1027 = vpop.permute.xlu0 %1026
  %1030 = vset.pattern.permute.xlu0 0
  %1031 = vperm.xlu0 %1030, %v685
  %v1032 = vpop.permute.xlu0 %1031
  %1035 = vset.pattern.permute.xlu0 0
  %1036 = vperm.xlu0 %1035, %v686
  %v1037 = vpop.permute.xlu0 %1036
  %v1039 = vadd.f32 %v847, %v882
  %v1040 = vadd.f32 %v848, %v887
  %v1041 = vadd.f32 %v849, %v892
  %v1042 = vadd.f32 %v850, %v897
  %v1043 = vadd.f32 %v851, %v902
  %v1044 = vadd.f32 %v852, %v907
  %v1045 = vadd.f32 %v853, %v912
  %v1046 = vadd.f32 %v854, %v917
  %v1047 = vadd.f32 %v855, %v922
  %v1048 = vadd.f32 %v856, %v927
  %v1049 = vadd.f32 %v857, %v932
  %v1050 = vadd.f32 %v858, %v937
  %v1051 = vadd.f32 %v859, %v942
  %v1052 = vadd.f32 %v860, %v947
  %v1053 = vadd.f32 %v861, %v952
  %v1054 = vadd.f32 %v862, %v957
  %v1055 = vadd.f32 %v863, %v962
  %v1056 = vadd.f32 %v864, %v967
  %v1057 = vadd.f32 %v865, %v972
  %v1058 = vadd.f32 %v866, %v977
  %v1059 = vadd.f32 %v867, %v982
  %v1060 = vadd.f32 %v868, %v987
  %v1061 = vadd.f32 %v869, %v992
  %v1062 = vadd.f32 %v870, %v997
  %v1063 = vadd.f32 %v871, %v1002
  %v1064 = vadd.f32 %v872, %v1007
  %v1065 = vadd.f32 %v873, %v1012
  %v1066 = vadd.f32 %v874, %v1017
  %v1067 = vadd.f32 %v875, %v1022
  %v1068 = vadd.f32 %v876, %v1027
  %v1069 = vadd.f32 %v877, %v1032
  %v1070 = vadd.f32 %v878, %v1037
  %1071 = vst.msk [vmem:[%s3] sm:$0xff] %vm46, %v1039
  %1072 = vst.msk [vmem:[%s3 + $0x8] sm:$0xff] %vm46, %v1040
  %1073 = vst.msk [vmem:[%s3 + $0x10] sm:$0xff] %vm46, %v1041
  %1074 = vst.msk [vmem:[%s3 + $0x18] sm:$0xff] %vm46, %v1042
  %1075 = vst.msk [vmem:[%s3 + $0x20] sm:$0xff] %vm46, %v1043
  %1076 = vst.msk [vmem:[%s3 + $0x28] sm:$0xff] %vm46, %v1044
  %1077 = vst.msk [vmem:[%s3 + $0x30] sm:$0xff] %vm46, %v1045
  %1078 = vst.msk [vmem:[%s3 + $0x38] sm:$0xff] %vm46, %v1046
  %1079 = vst.msk [vmem:[%s3 + $0x40] sm:$0xff] %vm46, %v1047
  %1080 = vst.msk [vmem:[%s3 + $0x48] sm:$0xff] %vm46, %v1048
  %1081 = vst.msk [vmem:[%s3 + $0x50] sm:$0xff] %vm46, %v1049
  %1082 = vst.msk [vmem:[%s3 + $0x58] sm:$0xff] %vm46, %v1050
  %1083 = vst.msk [vmem:[%s3 + $0x60] sm:$0xff] %vm46, %v1051
  %1084 = vst.msk [vmem:[%s3 + $0x68] sm:$0xff] %vm46, %v1052
  %1085 = vst.msk [vmem:[%s3 + $0x70] sm:$0xff] %vm46, %v1053
  %1086 = vst.msk [vmem:[%s3 + $0x78] sm:$0xff] %vm46, %v1054
  %1087 = vst.msk [vmem:[%s3 + $0x80] sm:$0xff] %vm46, %v1055
  %1088 = vst.msk [vmem:[%s3 + $0x88] sm:$0xff] %vm46, %v1056
  %1089 = vst.msk [vmem:[%s3 + $0x90] sm:$0xff] %vm46, %v1057
  %1090 = vst.msk [vmem:[%s3 + $0x98] sm:$0xff] %vm46, %v1058
  %1091 = vst.msk [vmem:[%s3 + $0xa0] sm:$0xff] %vm46, %v1059
  %1092 = vst.msk [vmem:[%s3 + $0xa8] sm:$0xff] %vm46, %v1060
  %1093 = vst.msk [vmem:[%s3 + $0xb0] sm:$0xff] %vm46, %v1061
  %1094 = vst.msk [vmem:[%s3 + $0xb8] sm:$0xff] %vm46, %v1062
  %1095 = vst.msk [vmem:[%s3 + $0xc0] sm:$0xff] %vm46, %v1063
  %1096 = vst.msk [vmem:[%s3 + $0xc8] sm:$0xff] %vm46, %v1064
  %1097 = vst.msk [vmem:[%s3 + $0xd0] sm:$0xff] %vm46, %v1065
  %1098 = vst.msk [vmem:[%s3 + $0xd8] sm:$0xff] %vm46, %v1066
  %1099 = vst.msk [vmem:[%s3 + $0xe0] sm:$0xff] %vm46, %v1067
  %1100 = vst.msk [vmem:[%s3 + $0xe8] sm:$0xff] %vm46, %v1068
  %1101 = vst.msk [vmem:[%s3 + $0xf0] sm:$0xff] %vm46, %v1069
  %1102 = vst.msk [vmem:[%s3 + $0xf8] sm:$0xff] %vm46, %v1070
  // Predicated region
  $region14: #{tpu_custom_call.1} parent=0 // pred_check
    _
  $region15: #{tpu_custom_call.1} parent=0 // pred_check_branch
    %1104 = sbr.rel (0) target = $region17
  $region16: #{tpu_custom_call.1} parent=0 // pred_region
    _
  $region17: #{tpu_custom_call.1} parent=0 // pred_fallthru
    _
  // Predicated region
  $region18: #{tpu_custom_call.1} parent=0 // pred_check
    _
  $region19: #{tpu_custom_call.1} parent=0 // pred_check_branch
    %1106 = sbr.rel (0) target = $region21
  $region20: #{tpu_custom_call.1} parent=0 // pred_region
    _
  $region21: #{tpu_custom_call.1} parent=0 // pred_fallthru
    _

</llo_original>
